<compile_context>
chip_gen: v7x
topology: tpu7x:2x2x1
jax: 0.10.0
libtpu: 0.0.40
codegen_flags: <defaults>
</compile_context>

<pallas_src>
import functools
import math

import jax
import jax.numpy as jnp
from jax.experimental import pallas as pl
from jax.experimental.pallas import tpu as pltpu


def _round_up(n: int, m: int) -> int:
    return ((n + m - 1) // m) * m


def _cdiv(a: int, b: int) -> int:
    return (a + b - 1) // b


def policy_kernel(xT_ref, w1_ref, b1_ref, w2_ref, b2_ref, outT_ref):
    """One batch tile, lane-dense (batch-in-lanes) layout.

      xT_ref  : (S, TB)  flattened states, transposed
      w1_ref  : (H, S)   fc1 weight (torch layout)
      b1_ref  : (H, 1)   fc1 bias
      w2_ref  : (A, H)   fc2 weight
      b2_ref  : (A, 1)   fc2 bias
      outT_ref: (A, TB)  softmax over the sublane (action) axis
    """
    # fc1 + bias + ReLU.  K=S is tiny for the MXU but compute is negligible;
    # the kernel is DMA / step-overhead bound.
    h = jnp.dot(w1_ref[...], xT_ref[...], preferred_element_type=jnp.float32)
    h = jnp.maximum(h + b1_ref[...], 0.0)

    # fc2 + bias.
    logits = jnp.dot(w2_ref[...], h, preferred_element_type=jnp.float32) + b2_ref[...]

    # Stable softmax over the action axis (axis 0 == sublanes; batch stays in
    # lanes, so max/sum are tiny cross-sublane ops and stores are lane-dense).
    m = jnp.max(logits, axis=0, keepdims=True)
    e = jnp.exp(logits - m)
    denom = jnp.sum(e, axis=0, keepdims=True)
    outT_ref[...] = (e * pl.reciprocal(denom, approx=False)).astype(outT_ref.dtype)


def _policy_forward_xla(x_flat, w1, b1, w2, b2):
    """Plain-XLA fallback for tiny act()-style batches."""
    h = jnp.maximum(x_flat @ w1.T + b1, 0.0)
    return jax.nn.softmax(h @ w2.T + b2, axis=1)


def policy_forward(x, w1, b1, w2, b2, *, tb=8192, min_pallas_batch=512):
    """x: (B, ...) float32 -> (B, a_size) softmax probabilities.

    Weights use the torch.nn.Linear layout:
      w1: (h_size, s_size), b1: (h_size,), w2: (a_size, h_size), b2: (a_size,)
    """
    B = x.shape[0]
    x_flat = x.reshape(B, -1).astype(jnp.float32)          # nn.Flatten()
    S = x_flat.shape[1]
    H = w1.shape[0]
    A = w2.shape[0]

    w1 = w1.astype(jnp.float32)
    b1 = b1.astype(jnp.float32)
    w2 = w2.astype(jnp.float32)
    b2 = b2.astype(jnp.float32)

    # Tiny batches: custom-call launch + HBM round trip would dominate.
    if B < min_pallas_batch:
        return _policy_forward_xla(x_flat, w1, b1, w2, b2)

    # ---- tile sizing ------------------------------------------------------
    tb = _round_up(max(int(tb), 128), 128)             # always a 128 multiple
    tb = min(tb, _round_up(B, 128))                    # no tile wider than B
    if B > 128:
        # Guarantee >= 2 grid steps so the parallel batch axis can shard
        # across both TensorCores on v7x.
        tb = min(tb, _round_up(_cdiv(B, 2), 128))
    b_pad = _round_up(B, tb)
    grid = (b_pad // tb,)

    # ---- lane-dense input: batch in the lane dimension --------------------
    xT = x_flat.T                                       # (S, B) — one XLA pass
    if b_pad != B:
        xT = jnp.pad(xT, ((0, 0), (0, b_pad - B)))      # fused with transpose

    cost = pl.CostEstimate(
        flops=2 * b_pad * (S * H + H * A),
        transcendentals=b_pad * A,
        bytes_accessed=4 * (b_pad * (S + A) + H * (S + 1) + A * (H + 1)),
    )

    outT = pl.pallas_call(
        policy_kernel,
        out_shape=jax.ShapeDtypeStruct((A, b_pad), jnp.float32),
        grid=grid,
        in_specs=[
            pl.BlockSpec((S, tb), lambda i: (0, i)),    # x tile, pipelined
            pl.BlockSpec((H, S), lambda i: (0, 0)),     # weights VMEM-resident
            pl.BlockSpec((H, 1), lambda i: (0, 0)),
            pl.BlockSpec((A, H), lambda i: (0, 0)),
            pl.BlockSpec((A, 1), lambda i: (0, 0)),
        ],
        out_specs=pl.BlockSpec((A, tb), lambda i: (0, i)),   # lane-dense stores
        compiler_params=pltpu.CompilerParams(
            dimension_semantics=("parallel",)),              # megacore on v7x
        cost_estimate=cost,
    )(xT, w1, b1[:, None], w2, b2[:, None])

    # Back to the PyTorch (B, A) convention; drop lane padding.
    return outT[:, :B].T


def init_policy_params(key, s_size=4, h_size=16, a_size=2):
    """Deterministic init mimicking nn.Linear default (U[-1/sqrt(fan_in), ..])."""
    k1, k2, k3, k4 = jax.random.split(key, 4)
    bnd1 = 1.0 / math.sqrt(s_size)
    bnd2 = 1.0 / math.sqrt(h_size)
    w1 = jax.random.uniform(k1, (h_size, s_size), jnp.float32, -bnd1, bnd1)
    b1 = jax.random.uniform(k2, (h_size,), jnp.float32, -bnd1, bnd1)
    w2 = jax.random.uniform(k3, (a_size, h_size), jnp.float32, -bnd2, bnd2)
    b2 = jax.random.uniform(k4, (a_size,), jnp.float32, -bnd2, bnd2)
    return w1, b1, w2, b2


def policy_forward_ref(x, w1, b1, w2, b2):
    x = x.reshape(x.shape[0], -1)
    h = jnp.maximum(x @ w1.T + b1, 0.0)
    logits = h @ w2.T + b2
    return jax.nn.softmax(logits, axis=1)


if __name__ == "__main__":
    key = jax.random.PRNGKey(0)
    kx, kp = jax.random.split(key)

    s_size, h_size, a_size = 4, 16, 2
    w1, b1, w2, b2 = init_policy_params(kp, s_size, h_size, a_size)

    fwd = jax.jit(policy_forward)                                   # auto dispatch
    fwd_force = jax.jit(functools.partial(policy_forward, min_pallas_batch=0))

    # Rollout-sized batch -> Pallas path (tb capped to ceil(B/2) -> 2 grid steps).
    batch = 1024
    x = jax.random.normal(kx, (batch, s_size), jnp.float32)
    probs = jax.block_until_ready(fwd(x, w1, b1, w2, b2))
    ref = policy_forward_ref(x, w1, b1, w2, b2)
    assert probs.shape == (batch, a_size)
    assert jnp.allclose(probs, ref, atol=1e-5, rtol=1e-5)
    assert jnp.allclose(jnp.sum(probs, axis=1), 1.0, atol=1e-5)

    # Medium batch, Pallas forced: exercises the 2-step grid with tb=128.
    x_mid = jax.random.normal(jax.random.fold_in(kx, 1), (256, s_size), jnp.float32)
    probs_mid = jax.block_until_ready(fwd_force(x_mid, w1, b1, w2, b2))
    ref_mid = policy_forward_ref(x_mid, w1, b1, w2, b2)
    assert probs_mid.shape == (256, a_size)
    assert jnp.allclose(probs_mid, ref_mid, atol=1e-5, rtol=1e-5)

    # Tiny act()-style batch -> plain-XLA fallback path.
    x_small = jax.random.normal(jax.random.fold_in(kx, 2), (2, s_size), jnp.float32)
    probs_small = jax.block_until_ready(fwd(x_small, w1, b1, w2, b2))
    ref_small = policy_forward_ref(x_small, w1, b1, w2, b2)
    assert probs_small.shape == (2, a_size)
    assert jnp.allclose(probs_small, ref_small, atol=1e-5, rtol=1e-5)

    # TODO(synk): Categorical sampling / log_prob from Policy.act() is host/XLA
    # RNG control flow, not part of the forward kernel.
    print("KERNEL_OK")
</pallas_src>

<mosaic_0001>
module attributes {stable_mosaic.version = 11 : i64} {
  func.func @policy_kernel(%arg0: i32, %arg1: memref<4x512xf32, #tpu.memory_space<vmem>>, %arg2: memref<16x4xf32, #tpu.memory_space<vmem>>, %arg3: memref<16x1xf32, #tpu.memory_space<vmem>>, %arg4: memref<2x16xf32, #tpu.memory_space<vmem>>, %arg5: memref<2x1xf32, #tpu.memory_space<vmem>>, %arg6: memref<2x512xf32, #tpu.memory_space<vmem>>) attributes {dimension_semantics = [#tpu.dimension_semantics<parallel>], iteration_bounds = array<i64: 2>, scalar_prefetch = 0 : i64, scratch_operands = 0 : i64, tpu.core_type = #tpu.core_type<tc>, window_params = [{transform_indices = @transform_0, window_bounds = array<i64: 4, 512>}, {pipeline_mode = #tpu.pipeline_mode<synchronous>, transform_indices = @transform_1, window_bounds = array<i64: 16, 4>}, {pipeline_mode = #tpu.pipeline_mode<synchronous>, transform_indices = @transform_2, window_bounds = array<i64: 16, 1>}, {pipeline_mode = #tpu.pipeline_mode<synchronous>, transform_indices = @transform_3, window_bounds = array<i64: 2, 16>}, {pipeline_mode = #tpu.pipeline_mode<synchronous>, transform_indices = @transform_4, window_bounds = array<i64: 2, 1>}, {transform_indices = @transform_5, window_bounds = array<i64: 2, 512>}]} {
    %c0 = arith.constant 0 : index
    %c0_0 = arith.constant 0 : index
    %0 = vector.load %arg2[%c0, %c0_0] : memref<16x4xf32, #tpu.memory_space<vmem>>, vector<16x4xf32>
    %c0_1 = arith.constant 0 : index
    %c0_2 = arith.constant 0 : index
    %1 = vector.load %arg1[%c0_1, %c0_2] : memref<4x512xf32, #tpu.memory_space<vmem>>, vector<4x512xf32>
    %cst = arith.constant dense<0.000000e+00> : vector<16x512xf32>
    %2 = tpu.matmul %0, %1, %cst {dimension_numbers = #tpu.dot_dimension_numbers<[1], [0], [0], [1], [0, 0, 1, 1], [], []>} : vector<16x4xf32>, vector<4x512xf32>, vector<16x512xf32> -> vector<16x512xf32>
    %c0_3 = arith.constant 0 : index
    %c0_4 = arith.constant 0 : index
    %3 = vector.load %arg3[%c0_3, %c0_4] : memref<16x1xf32, #tpu.memory_space<vmem>>, vector<16x1xf32>
    %4 = vector.broadcast %3 : vector<16x1xf32> to vector<16x512xf32>
    %5 = arith.addf %2, %4 : vector<16x512xf32>
    %cst_5 = arith.constant 0.000000e+00 : f32
    %6 = vector.broadcast %cst_5 : f32 to vector<16x512xf32>
    %7 = arith.maximumf %5, %6 : vector<16x512xf32>
    %c0_6 = arith.constant 0 : index
    %c0_7 = arith.constant 0 : index
    %8 = vector.load %arg4[%c0_6, %c0_7] : memref<2x16xf32, #tpu.memory_space<vmem>>, vector<2x16xf32>
    %cst_8 = arith.constant dense<0.000000e+00> : vector<2x512xf32>
    %9 = tpu.matmul %8, %7, %cst_8 {dimension_numbers = #tpu.dot_dimension_numbers<[1], [0], [0], [1], [0, 0, 1, 1], [], []>} : vector<2x16xf32>, vector<16x512xf32>, vector<2x512xf32> -> vector<2x512xf32>
    %c0_9 = arith.constant 0 : index
    %c0_10 = arith.constant 0 : index
    %10 = vector.load %arg5[%c0_9, %c0_10] : memref<2x1xf32, #tpu.memory_space<vmem>>, vector<2x1xf32>
    %11 = vector.broadcast %10 : vector<2x1xf32> to vector<2x512xf32>
    %12 = arith.addf %9, %11 : vector<2x512xf32>
    %cst_11 = arith.constant dense<0xFF800000> : vector<512xf32>
    %13 = vector.multi_reduction <maximumf>, %12, %cst_11 [0] : vector<2x512xf32> to vector<512xf32>
    %14 = vector.shape_cast %13 : vector<512xf32> to vector<1x512xf32>
    %15 = vector.broadcast %14 : vector<1x512xf32> to vector<2x512xf32>
    %16 = arith.subf %12, %15 : vector<2x512xf32>
    %17 = math.exp %16 : vector<2x512xf32>
    %cst_12 = arith.constant dense<0.000000e+00> : vector<512xf32>
    %18 = vector.multi_reduction <add>, %17, %cst_12 [0] : vector<2x512xf32> to vector<512xf32>
    %19 = vector.shape_cast %18 : vector<512xf32> to vector<1x512xf32>
    %20 = tpu.reciprocal %19 : vector<1x512xf32> -> vector<1x512xf32>
    %21 = vector.broadcast %20 : vector<1x512xf32> to vector<2x512xf32>
    %22 = arith.mulf %17, %21 : vector<2x512xf32>
    %c0_13 = arith.constant 0 : index
    %c0_14 = arith.constant 0 : index
    %23 = vector.load %arg6[%c0_13, %c0_14] : memref<2x512xf32, #tpu.memory_space<vmem>>, vector<2x512xf32>
    tpu.vector_store %arg6[%c0_13, %c0_14], %22 {strides = array<i32>} : memref<2x512xf32, #tpu.memory_space<vmem>>, vector<2x512xf32>,
    return
  }
  func.func @transform_0(%arg0: i32) -> (i32, i32) {
    %c0_i32 = arith.constant 0 : i32
    %c0_i32_0 = arith.constant 0 : i32
    return %c0_i32, %arg0 : i32, i32
  }
  func.func @transform_1(%arg0: i32) -> (i32, i32) {
    %c0_i32 = arith.constant 0 : i32
    %c0_i32_0 = arith.constant 0 : i32
    %c0_i32_1 = arith.constant 0 : i32
    return %c0_i32, %c0_i32_0 : i32, i32
  }
  func.func @transform_2(%arg0: i32) -> (i32, i32) {
    %c0_i32 = arith.constant 0 : i32
    %c0_i32_0 = arith.constant 0 : i32
    %c0_i32_1 = arith.constant 0 : i32
    return %c0_i32, %c0_i32_0 : i32, i32
  }
  func.func @transform_3(%arg0: i32) -> (i32, i32) {
    %c0_i32 = arith.constant 0 : i32
    %c0_i32_0 = arith.constant 0 : i32
    %c0_i32_1 = arith.constant 0 : i32
    return %c0_i32, %c0_i32_0 : i32, i32
  }
  func.func @transform_4(%arg0: i32) -> (i32, i32) {
    %c0_i32 = arith.constant 0 : i32
    %c0_i32_0 = arith.constant 0 : i32
    %c0_i32_1 = arith.constant 0 : i32
    return %c0_i32, %c0_i32_0 : i32, i32
  }
  func.func @transform_5(%arg0: i32) -> (i32, i32) {
    %c0_i32 = arith.constant 0 : i32
    %c0_i32_0 = arith.constant 0 : i32
    return %c0_i32, %arg0 : i32, i32
  }
}

</mosaic_0001>

<llo_original>
// kernel: policy_forward.1
$region0: #{policy_forward.1}
  #allocation0 [shape = 'u32[]', space=smem, size = 0x4, offset = 0x4, fixed_abs, tag = 'smem constant byte address 0x4 - core index']
  #allocation1 [shape = 'u32[144,128]{1,0:T(1,128)}', space=vmem, size = 0x12000, scoped, tag = 'internal scratch']
  %s0 = inlined_call_operand.vmem [shape: f32[4,1024], index: 0, kind: input, shape index: {}]
  %s1 = inlined_call_operand.vmem [shape: f32[16,4], index: 1, kind: input, shape index: {}]
  %s2 = inlined_call_operand.vmem [shape: f32[16,1], index: 2, kind: input, shape index: {}]
  %s3 = inlined_call_operand.vmem [shape: f32[2,16], index: 3, kind: input, shape index: {}]
  %s4 = inlined_call_operand.vmem [shape: f32[2,1], index: 4, kind: input, shape index: {}]
  %s5 = inlined_call_operand.hbm [shape: f32[2,1024], index: 5, kind: output, shape index: {}]
  %s6 = sld [smem:[#allocation0]]
  $region53: #{policy_forward.1} parent=0
    _
  %s8 = ssub.s32 1, %s6
  %s9 = scalar_select 0, %s8, %s6
  $region1: #{policy_forward.1} parent=0
    #allocation2 [shape = 'u8[8192]{0}', space=vmem, size = 0x2000, scoped, tag = 'output window, operand 0']
    #allocation3 [shape = 's32[2]{0}', space=sflag, size = 0x8, scoped, tag = 'scoped memory for policy_forward.1']
    %10 = vsyncpa [#allocation3], 0
    %s11 = scalar_lea.sflag [#allocation3], 1
    %12 = vsyncpa %s11, 0
    loop: start=0, step=1, limit=4
    $region2: #{policy_forward.1} parent=1 // loop_pre_header
      _
    $region3: #{policy_forward.1} parent=1 // loop_header
      %s14 = sphi 0, %s18
      %p15 = scmp.ge.s32.totalorder %s14, 4
      %s24 = sphi 0, %s26
      %s27 = sphi 0, %s24
      %s28 = sphi 0, %s27
      %s44 = sphi 0, %s28
      %s48 = sphi 0, %s48
      %s50 = sphi 0, %s48
      %s51 = sphi 0, %s50
      %s65 = sphi 0, %s51
      %s69 = sphi 0, %s69
      %s71 = sphi 0, %s69
      %s72 = sphi 0, %s71
      %s86 = sphi 0, %s72
      %s90 = sphi 0, %s90
      %s92 = sphi 0, %s90
      %s93 = sphi 0, %s92
      %s107 = sphi 0, %s93
      %s111 = sphi 0, %s111
      %s113 = sphi 0, %s111
      %s114 = sphi 0, %s113
      %s128 = sphi 0, %s114
      %s134 = sphi 0, %s136
      %s137 = sphi 0, %s134
      %s138 = sphi 0, %s137
      %s154 = sphi 0, %s138
    $region4: #{policy_forward.1} parent=1 // loop_header_branch
      %17 = sbr.rel (%p15) target = $region8
    $region5: #{policy_forward.1} parent=1 // loop_body
      %s19 = ssub.s32 %s14, 1
      %s20 = ssub.s32 %s14, 2
      %s21 = sadd.s32 %s14, 1
      %s22 = ssub.s32 %s14, %s21
      %p23 = scmp.eq.s32.totalorder %s22, 0
      %s25 = sadd.s32 %s24, 1
      %s26 = scalar_select %p23, %s24, %s25
      %p29 = pneg %p23
      %p30 = scmp.eq.s32.totalorder %s14, 1
      %p31 = por %p29, %p30
      %p32 = scmp.ne.s32.totalorder %s24, %s27
      %p33 = scmp.eq.s32.totalorder %s14, 0
      %p34 = por %p32, %p33
      %p35 = scmp.ne.s32.totalorder %s24, %s27
      %p36 = scmp.eq.s32.totalorder %s19, 1
      %p37 = por %p35, %p36
      %p38 = scmp.ne.s32.totalorder %s27, %s28
      %p39 = scmp.eq.s32.totalorder %s19, 0
      %p40 = por %p38, %p39
      %p41 = scmp.ne.s32.totalorder %s27, %s28
      %p42 = scmp.eq.s32.totalorder %s20, 1
      %p43 = por %p41, %p42
      %p45 = scmp.ne.s32.totalorder %s28, %s44
      %p46 = scmp.eq.s32.totalorder %s20, 0
      %p47 = por %p45, %p46
      %s49 = sadd.s32 %s48, 1
      %p52 = scmp.eq.s32.totalorder %s14, 1
      %p53 = scmp.ne.s32.totalorder %s48, %s50
      %p54 = scmp.eq.s32.totalorder %s14, 0
      %p55 = por %p53, %p54
      %p56 = scmp.ne.s32.totalorder %s48, %s50
      %p57 = scmp.eq.s32.totalorder %s19, 1
      %p58 = por %p56, %p57
      %p59 = scmp.ne.s32.totalorder %s50, %s51
      %p60 = scmp.eq.s32.totalorder %s19, 0
      %p61 = por %p59, %p60
      %p62 = scmp.ne.s32.totalorder %s50, %s51
      %p63 = scmp.eq.s32.totalorder %s20, 1
      %p64 = por %p62, %p63
      %p66 = scmp.ne.s32.totalorder %s51, %s65
      %p67 = scmp.eq.s32.totalorder %s20, 0
      %p68 = por %p66, %p67
      %s70 = sadd.s32 %s69, 1
      %p73 = scmp.eq.s32.totalorder %s14, 1
      %p74 = scmp.ne.s32.totalorder %s69, %s71
      %p75 = scmp.eq.s32.totalorder %s14, 0
      %p76 = por %p74, %p75
      %p77 = scmp.ne.s32.totalorder %s69, %s71
      %p78 = scmp.eq.s32.totalorder %s19, 1
      %p79 = por %p77, %p78
      %p80 = scmp.ne.s32.totalorder %s71, %s72
      %p81 = scmp.eq.s32.totalorder %s19, 0
      %p82 = por %p80, %p81
      %p83 = scmp.ne.s32.totalorder %s71, %s72
      %p84 = scmp.eq.s32.totalorder %s20, 1
      %p85 = por %p83, %p84
      %p87 = scmp.ne.s32.totalorder %s72, %s86
      %p88 = scmp.eq.s32.totalorder %s20, 0
      %p89 = por %p87, %p88
      %s91 = sadd.s32 %s90, 1
      %p94 = scmp.eq.s32.totalorder %s14, 1
      %p95 = scmp.ne.s32.totalorder %s90, %s92
      %p96 = scmp.eq.s32.totalorder %s14, 0
      %p97 = por %p95, %p96
      %p98 = scmp.ne.s32.totalorder %s90, %s92
      %p99 = scmp.eq.s32.totalorder %s19, 1
      %p100 = por %p98, %p99
      %p101 = scmp.ne.s32.totalorder %s92, %s93
      %p102 = scmp.eq.s32.totalorder %s19, 0
      %p103 = por %p101, %p102
      %p104 = scmp.ne.s32.totalorder %s92, %s93
      %p105 = scmp.eq.s32.totalorder %s20, 1
      %p106 = por %p104, %p105
      %p108 = scmp.ne.s32.totalorder %s93, %s107
      %p109 = scmp.eq.s32.totalorder %s20, 0
      %p110 = por %p108, %p109
      %s112 = sadd.s32 %s111, 1
      %p115 = scmp.eq.s32.totalorder %s14, 1
      %p116 = scmp.ne.s32.totalorder %s111, %s113
      %p117 = scmp.eq.s32.totalorder %s14, 0
      %p118 = por %p116, %p117
      %p119 = scmp.ne.s32.totalorder %s111, %s113
      %p120 = scmp.eq.s32.totalorder %s19, 1
      %p121 = por %p119, %p120
      %p122 = scmp.ne.s32.totalorder %s113, %s114
      %p123 = scmp.eq.s32.totalorder %s19, 0
      %p124 = por %p122, %p123
      %p125 = scmp.ne.s32.totalorder %s113, %s114
      %p126 = scmp.eq.s32.totalorder %s20, 1
      %p127 = por %p125, %p126
      %p129 = scmp.ne.s32.totalorder %s114, %s128
      %p130 = scmp.eq.s32.totalorder %s20, 0
      %p131 = por %p129, %p130
      %s132 = ssub.s32 %s14, %s21
      %p133 = scmp.eq.s32.totalorder %s132, 0
      %s135 = sadd.s32 %s134, 1
      %s136 = scalar_select %p133, %s134, %s135
      %p139 = pneg %p133
      %p140 = scmp.eq.s32.totalorder %s14, 1
      %p141 = por %p139, %p140
      %p142 = scmp.ne.s32.totalorder %s134, %s137
      %p143 = scmp.eq.s32.totalorder %s14, 0
      %p144 = por %p142, %p143
      %p145 = scmp.ne.s32.totalorder %s134, %s137
      %p146 = scmp.eq.s32.totalorder %s19, 1
      %p147 = por %p145, %p146
      %p148 = scmp.ne.s32.totalorder %s137, %s138
      %p149 = scmp.eq.s32.totalorder %s19, 0
      %p150 = por %p148, %p149
      %p151 = scmp.ne.s32.totalorder %s137, %s138
      %p152 = scmp.eq.s32.totalorder %s20, 1
      %p153 = por %p151, %p152
      %p155 = scmp.ne.s32.totalorder %s138, %s154
      %p156 = scmp.eq.s32.totalorder %s20, 0
      %p157 = por %p155, %p156
      %p158 = scmp.le.s32.totalorder 1, %s14
      %p159 = scmp.lt.s32.totalorder %s14, 3
      %p160 = pnand %p158, %p159
      %p161 = pneg %p160
      // Predicated region
      $region9: #{policy_forward.1} parent=5 // pred_check
        _
      $region10: #{policy_forward.1} parent=5 // pred_check_branch
        %163 = sbr.rel (%p160) target = $region12
      $region11: #{policy_forward.1} parent=5 // pred_region
        %s164 = ssub.s32 %s14, 1
        // Predicated region
        $region13: #{policy_forward.1} parent=11 // pred_check
          %p165 = pneg %p61
        $region14: #{policy_forward.1} parent=11 // pred_check_branch
          %167 = sbr.rel (%p165) target = $region16
        $region15: #{policy_forward.1} parent=11 // pred_region
          _
        $region16: #{policy_forward.1} parent=11 // pred_fallthru
          _
        // Predicated region
        $region17: #{policy_forward.1} parent=11 // pred_check
          %p168 = pneg %p82
        $region18: #{policy_forward.1} parent=11 // pred_check_branch
          %170 = sbr.rel (%p168) target = $region20
        $region19: #{policy_forward.1} parent=11 // pred_region
          _
        $region20: #{policy_forward.1} parent=11 // pred_fallthru
          _
        // Predicated region
        $region21: #{policy_forward.1} parent=11 // pred_check
          %p171 = pneg %p103
        $region22: #{policy_forward.1} parent=11 // pred_check_branch
          %173 = sbr.rel (%p171) target = $region24
        $region23: #{policy_forward.1} parent=11 // pred_region
          _
        $region24: #{policy_forward.1} parent=11 // pred_fallthru
          _
        // Predicated region
        $region25: #{policy_forward.1} parent=11 // pred_check
          %p174 = pneg %p124
        $region26: #{policy_forward.1} parent=11 // pred_check_branch
          %176 = sbr.rel (%p174) target = $region28
        $region27: #{policy_forward.1} parent=11 // pred_region
          _
        $region28: #{policy_forward.1} parent=11 // pred_fallthru
          _
      $region12: #{policy_forward.1} parent=5 // pred_fallthru
        _
      %p177 = scmp.lt.s32.totalorder %s14, 2
      // Predicated region
      $region29: #{policy_forward.1} parent=5 // pred_check
        %p178 = pneg %p177
      $region30: #{policy_forward.1} parent=5 // pred_check_branch
        %180 = sbr.rel (%p178) target = $region32
      $region31: #{policy_forward.1} parent=5 // pred_region
        // Predicated region
        $region33: #{policy_forward.1} parent=31 // pred_check
          %p181 = pneg %p34
        $region34: #{policy_forward.1} parent=31 // pred_check_branch
          %183 = sbr.rel (%p181) target = $region36
        $region35: #{policy_forward.1} parent=31 // pred_region
          %s184 = smul.u32 4, %s14
          %p185 = scmp.lt.s32.totalorder %s184, 7
          %s186 = scalar_select %p185, %s184, 7
          %s187 = smul.addr %s186, 4
          %s188 = scalar_lea.vmem %s0, %s187
          %s189 = smul.u32 4, %s14
        $region36: #{policy_forward.1} parent=31 // pred_fallthru
          _
      $region32: #{policy_forward.1} parent=5 // pred_fallthru
        _
      %p190 = scmp.le.s32.totalorder 1, %s14
      %p191 = scmp.lt.s32.totalorder %s14, 3
      %p192 = pnand %p190, %p191
      %p193 = pneg %p192
      // Predicated region
      $region37: #{policy_forward.1} parent=5 // pred_check
        _
      $region38: #{policy_forward.1} parent=5 // pred_check_branch
        %195 = sbr.rel (%p192) target = $region40
      $region39: #{policy_forward.1} parent=5 // pred_region
        %s196 = ssub.s32 %s14, 1
        %s197 = smul.u32 4, %s19
        %p198 = scmp.lt.s32.totalorder %s197, 7
        %s199 = scalar_select %p198, %s197, 7
        %s200 = smul.addr %s199, 4
        %s201 = scalar_lea.vmem %s0, %s200
        %p202 = pneg %p40
        %p203 = pneg %p37
        %p204 = pneg %p61
        %p205 = pneg %p58
        %p206 = pneg %p82
        %p207 = pneg %p79
        %p208 = pneg %p103
        %p209 = pneg %p100
        %p210 = pneg %p124
        %p211 = pneg %p121
        %p212 = pneg %p150
        %p213 = pneg %p147
        %s214 = sand.u32 %s137, 1
        %s215 = scalar_lea.sflag [#allocation3], %s214
        %s216 = sand.u32 %s137, 1
        %s217 = smul.addr %s216, 8
        %s218 = scalar_lea.vmem [#allocation2], %s217
        %s219 = smul.u32 4, %s19
        %p220 = scmp.lt.s32.totalorder %s219, 7
        %s221 = scalar_select %p220, %s219, 7
        %s222 = smul.addr %s221, 4
        %s223 = scalar_lea.vmem %s0, %s222
        %s224 = smul.u32 4, %s19
        %s225 = smul.u32 4, %s19
        %v226 = vld [vmem:[%s1] sm:$0xff]
        %v227 = vld [vmem:[%s1 + $0x8] sm:$0xff]
        %v228 = vld [vmem:[%s223] sm:$0xff]
        %v229 = vld [vmem:[%s223 + $0x8] sm:$0xff]
        %v230 = vld [vmem:[%s2] sm:$0xff]
        %v231 = vld [vmem:[%s2 + $0x8] sm:$0xff]
        %233 = vset.pattern.permute.xlu0 0
        %234 = vperm.xlu0 %233, %v230
        %v235 = vpop.permute.xlu0 %234
        %238 = vset.pattern.permute.xlu0 0
        %239 = vperm.xlu0 %238, %v231
        %v240 = vpop.permute.xlu0 %239
        %v244 = vcombine.high %v228, %v228
        %v245 = vcombine.high %v229, %v229
        %vm246 = vcmask 31744
        %v248 = vsel %vm246, %v226, 0
        %v251 = vsel %vm246, %v227, 0
        %vm253 = vcmask 1043456
        %v254 = vsel %vm253, %v228, 0
        %v256 = vsel %vm253, %v244, 0
        %v258 = vsel %vm253, %v229, 0
        %v260 = vsel %vm253, %v245, 0
        %262 = vmatprep.subr.mxu0 %v256
        %263 = vmatpush1.msra.mxu0 %v254
        %264 = vmatprep.subr.mxu0 0.0
        %265 = vmatpush1.msra.mxu0 0.0
        %266 = vmatprep.subr.mxu0 0.0
        %267 = vmatpush1.msra.mxu0 0.0
        %268 = vmatprep.subr.mxu0 0.0
        %269 = vmatpush1.msra.mxu0 0.0
        %270 = vmatprep.subr.mxu0 0.0
        %271 = vmatpush1.msra.mxu0 0.0
        %272 = vmatprep.subr.mxu0 0.0
        %273 = vmatpush1.msra.mxu0 0.0
        %274 = vmatprep.subr.mxu0 0.0
        %275 = vmatpush1.msra.mxu0 0.0
        %276 = vmatprep.subr.mxu0 0.0
        %277 = vmatpush1.msra.mxu0 0.0
        %278 = vmatprep.subr.mxu0 0.0
        %279 = vmatpush1.msra.mxu0 0.0
        %280 = vmatprep.subr.mxu0 0.0
        %281 = vmatpush1.msra.mxu0 0.0
        %282 = vmatprep.subr.mxu0 0.0
        %283 = vmatpush1.msra.mxu0 0.0
        %284 = vmatprep.subr.mxu0 0.0
        %285 = vmatpush1.msra.mxu0 0.0
        %286 = vmatprep.subr.mxu0 0.0
        %287 = vmatpush1.msra.mxu0 0.0
        %288 = vmatprep.subr.mxu0 0.0
        %289 = vmatpush1.msra.mxu0 0.0
        %290 = vmatprep.subr.mxu0 0.0
        %291 = vmatpush1.msra.mxu0 0.0
        %292 = vmatprep.subr.mxu0 0.0
        %293 = vmatpush1.msra.mxu0 0.0
        %294 = vmatprep.subr.mxu0 0.0
        %295 = vmatpush1.msra.mxu0 0.0
        %296 = vmatprep.subr.mxu0 0.0
        %297 = vmatpush1.msra.mxu0 0.0
        %298 = vmatprep.subr.mxu0 0.0
        %299 = vmatpush1.msra.mxu0 0.0
        %300 = vmatprep.subr.mxu0 0.0
        %301 = vmatpush1.msra.mxu0 0.0
        %302 = vmatprep.subr.mxu0 0.0
        %303 = vmatpush1.msra.mxu0 0.0
        %304 = vmatprep.subr.mxu0 0.0
        %305 = vmatpush1.msra.mxu0 0.0
        %306 = vmatprep.subr.mxu0 0.0
        %307 = vmatpush1.msra.mxu0 0.0
        %308 = vmatprep.subr.mxu0 0.0
        %309 = vmatpush1.msra.mxu0 0.0
        %310 = vmatprep.subr.mxu0 0.0
        %311 = vmatpush1.msra.mxu0 0.0
        %312 = vmatprep.subr.mxu0 0.0
        %313 = vmatpush1.msra.mxu0 0.0
        %314 = vmatprep.subr.mxu0 0.0
        %315 = vmatpush1.msra.mxu0 0.0
        %316 = vmatprep.subr.mxu0 0.0
        %317 = vmatpush1.msra.mxu0 0.0
        %318 = vmatprep.subr.mxu0 0.0
        %319 = vmatpush1.msra.mxu0 0.0
        %320 = vmatprep.subr.mxu0 0.0
        %321 = vmatpush1.msra.mxu0 0.0
        %322 = vmatprep.subr.mxu0 0.0
        %323 = vmatpush1.msra.mxu0 0.0
        %324 = vmatprep.subr.mxu0 0.0
        %325 = vmatpush1.msra.mxu0 0.0
        %326 = vmatprep.mubr.f32.mxu0 0.0
        %327 = vmatmul.mubr.f32.gmra.mrb[0].mxu0 %v248
        %v328 = vpop.f32.mrb[0].mxu0
        %v329 = vadd.f32 %v235, %v328
        %v330 = vpop.f32.mrb[0].mxu0
        %v331 = vadd.f32 %v235, %v330
        %332 = vmatprep.mubr.f32.mxu0 0.0
        %333 = vmatmul.mubr.f32.gmra.mrb[0].mxu0 %v251
        %v334 = vpop.f32.mrb[0].mxu0
        %v335 = vadd.f32 %v240, %v334
        %v336 = vpop.f32.mrb[0].mxu0
        %v337 = vadd.f32 %v240, %v336
        %338 = vdwg.mxu0
        %339 = vmatprep.subr.mxu0 %v260
        %340 = vmatpush1.msra.mxu0 %v258
        %341 = vmatprep.subr.mxu0 0.0
        %342 = vmatpush1.msra.mxu0 0.0
        %343 = vmatprep.subr.mxu0 0.0
        %344 = vmatpush1.msra.mxu0 0.0
        %345 = vmatprep.subr.mxu0 0.0
        %346 = vmatpush1.msra.mxu0 0.0
        %347 = vmatprep.subr.mxu0 0.0
        %348 = vmatpush1.msra.mxu0 0.0
        %349 = vmatprep.subr.mxu0 0.0
        %350 = vmatpush1.msra.mxu0 0.0
        %351 = vmatprep.subr.mxu0 0.0
        %352 = vmatpush1.msra.mxu0 0.0
        %353 = vmatprep.subr.mxu0 0.0
        %354 = vmatpush1.msra.mxu0 0.0
        %355 = vmatprep.subr.mxu0 0.0
        %356 = vmatpush1.msra.mxu0 0.0
        %357 = vmatprep.subr.mxu0 0.0
        %358 = vmatpush1.msra.mxu0 0.0
        %359 = vmatprep.subr.mxu0 0.0
        %360 = vmatpush1.msra.mxu0 0.0
        %361 = vmatprep.subr.mxu0 0.0
        %362 = vmatpush1.msra.mxu0 0.0
        %363 = vmatprep.subr.mxu0 0.0
        %364 = vmatpush1.msra.mxu0 0.0
        %365 = vmatprep.subr.mxu0 0.0
        %366 = vmatpush1.msra.mxu0 0.0
        %367 = vmatprep.subr.mxu0 0.0
        %368 = vmatpush1.msra.mxu0 0.0
        %369 = vmatprep.subr.mxu0 0.0
        %370 = vmatpush1.msra.mxu0 0.0
        %371 = vmatprep.subr.mxu0 0.0
        %372 = vmatpush1.msra.mxu0 0.0
        %373 = vmatprep.subr.mxu0 0.0
        %374 = vmatpush1.msra.mxu0 0.0
        %375 = vmatprep.subr.mxu0 0.0
        %376 = vmatpush1.msra.mxu0 0.0
        %377 = vmatprep.subr.mxu0 0.0
        %378 = vmatpush1.msra.mxu0 0.0
        %379 = vmatprep.subr.mxu0 0.0
        %380 = vmatpush1.msra.mxu0 0.0
        %381 = vmatprep.subr.mxu0 0.0
        %382 = vmatpush1.msra.mxu0 0.0
        %383 = vmatprep.subr.mxu0 0.0
        %384 = vmatpush1.msra.mxu0 0.0
        %385 = vmatprep.subr.mxu0 0.0
        %386 = vmatpush1.msra.mxu0 0.0
        %387 = vmatprep.subr.mxu0 0.0
        %388 = vmatpush1.msra.mxu0 0.0
        %389 = vmatprep.subr.mxu0 0.0
        %390 = vmatpush1.msra.mxu0 0.0
        %391 = vmatprep.subr.mxu0 0.0
        %392 = vmatpush1.msra.mxu0 0.0
        %393 = vmatprep.subr.mxu0 0.0
        %394 = vmatpush1.msra.mxu0 0.0
        %395 = vmatprep.subr.mxu0 0.0
        %396 = vmatpush1.msra.mxu0 0.0
        %397 = vmatprep.subr.mxu0 0.0
        %398 = vmatpush1.msra.mxu0 0.0
        %399 = vmatprep.subr.mxu0 0.0
        %400 = vmatpush1.msra.mxu0 0.0
        %401 = vmatprep.subr.mxu0 0.0
        %402 = vmatpush1.msra.mxu0 0.0
        %403 = vmatprep.mubr.f32.mxu0 0.0
        %404 = vmatmul.mubr.f32.gmra.mrb[0].mxu0 %v248
        %v405 = vpop.f32.mrb[0].mxu0
        %v406 = vadd.f32 %v235, %v405
        %v407 = vpop.f32.mrb[0].mxu0
        %v408 = vadd.f32 %v235, %v407
        %409 = vmatprep.mubr.f32.mxu0 0.0
        %410 = vmatmul.mubr.f32.gmra.mrb[0].mxu0 %v251
        %v411 = vpop.f32.mrb[0].mxu0
        %v412 = vadd.f32 %v240, %v411
        %v413 = vpop.f32.mrb[0].mxu0
        %v414 = vadd.f32 %v240, %v413
        %415 = vdwg.mxu0
        %v416 = vmax.f32 %v329, 0.0
        %v417 = vmax.f32 %v331, 0.0
        %v418 = vmax.f32 %v406, 0.0
        %v419 = vmax.f32 %v408, 0.0
        %v420 = vmax.f32 %v335, 0.0
        %v421 = vmax.f32 %v337, 0.0
        %v422 = vmax.f32 %v412, 0.0
        %v423 = vmax.f32 %v414, 0.0
        %v424 = vld [vmem:[%s3] sm:$0x3]
        %v425 = vld [vmem:[%s4] sm:$0x3]
        %427 = vset.pattern.permute.xlu0 0
        %428 = vperm.xlu0 %427, %v425
        %v429 = vpop.permute.xlu0 %428
        %vm431 = vcmask 130048
        %v433 = vsel %vm431, %v424, 0
        %435 = vmatprep.subr.mxu0 %v417
        %436 = vmatpush1.msra.mxu0 %v416
        %437 = vmatprep.subr.mxu0 %v421
        %438 = vmatpush1.msra.mxu0 %v420
        %439 = vmatprep.subr.mxu0 0.0
        %440 = vmatpush1.msra.mxu0 0.0
        %441 = vmatprep.subr.mxu0 0.0
        %442 = vmatpush1.msra.mxu0 0.0
        %443 = vmatprep.subr.mxu0 0.0
        %444 = vmatpush1.msra.mxu0 0.0
        %445 = vmatprep.subr.mxu0 0.0
        %446 = vmatpush1.msra.mxu0 0.0
        %447 = vmatprep.subr.mxu0 0.0
        %448 = vmatpush1.msra.mxu0 0.0
        %449 = vmatprep.subr.mxu0 0.0
        %450 = vmatpush1.msra.mxu0 0.0
        %451 = vmatprep.subr.mxu0 0.0
        %452 = vmatpush1.msra.mxu0 0.0
        %453 = vmatprep.subr.mxu0 0.0
        %454 = vmatpush1.msra.mxu0 0.0
        %455 = vmatprep.subr.mxu0 0.0
        %456 = vmatpush1.msra.mxu0 0.0
        %457 = vmatprep.subr.mxu0 0.0
        %458 = vmatpush1.msra.mxu0 0.0
        %459 = vmatprep.subr.mxu0 0.0
        %460 = vmatpush1.msra.mxu0 0.0
        %461 = vmatprep.subr.mxu0 0.0
        %462 = vmatpush1.msra.mxu0 0.0
        %463 = vmatprep.subr.mxu0 0.0
        %464 = vmatpush1.msra.mxu0 0.0
        %465 = vmatprep.subr.mxu0 0.0
        %466 = vmatpush1.msra.mxu0 0.0
        %467 = vmatprep.subr.mxu0 0.0
        %468 = vmatpush1.msra.mxu0 0.0
        %469 = vmatprep.subr.mxu0 0.0
        %470 = vmatpush1.msra.mxu0 0.0
        %471 = vmatprep.subr.mxu0 0.0
        %472 = vmatpush1.msra.mxu0 0.0
        %473 = vmatprep.subr.mxu0 0.0
        %474 = vmatpush1.msra.mxu0 0.0
        %475 = vmatprep.subr.mxu0 0.0
        %476 = vmatpush1.msra.mxu0 0.0
        %477 = vmatprep.subr.mxu0 0.0
        %478 = vmatpush1.msra.mxu0 0.0
        %479 = vmatprep.subr.mxu0 0.0
        %480 = vmatpush1.msra.mxu0 0.0
        %481 = vmatprep.subr.mxu0 0.0
        %482 = vmatpush1.msra.mxu0 0.0
        %483 = vmatprep.subr.mxu0 0.0
        %484 = vmatpush1.msra.mxu0 0.0
        %485 = vmatprep.subr.mxu0 0.0
        %486 = vmatpush1.msra.mxu0 0.0
        %487 = vmatprep.subr.mxu0 0.0
        %488 = vmatpush1.msra.mxu0 0.0
        %489 = vmatprep.subr.mxu0 0.0
        %490 = vmatpush1.msra.mxu0 0.0
        %491 = vmatprep.subr.mxu0 0.0
        %492 = vmatpush1.msra.mxu0 0.0
        %493 = vmatprep.subr.mxu0 0.0
        %494 = vmatpush1.msra.mxu0 0.0
        %495 = vmatprep.subr.mxu0 0.0
        %496 = vmatpush1.msra.mxu0 0.0
        %497 = vmatprep.subr.mxu0 0.0
        %498 = vmatpush1.msra.mxu0 0.0
        %499 = vmatprep.mubr.f32.mxu0 0.0
        %500 = vmatmul.mubr.f32.gmra.mrb[0].mxu0 %v433
        %v501 = vpop.f32.mrb[0].mxu0
        %v502 = vadd.f32 %v429, %v501
        %v503 = vpop.f32.mrb[0].mxu0
        %v504 = vadd.f32 %v429, %v503
        %505 = vdwg.mxu0
        %506 = vmatprep.subr.mxu0 %v419
        %507 = vmatpush1.msra.mxu0 %v418
        %508 = vmatprep.subr.mxu0 %v423
        %509 = vmatpush1.msra.mxu0 %v422
        %510 = vmatprep.subr.mxu0 0.0
        %511 = vmatpush1.msra.mxu0 0.0
        %512 = vmatprep.subr.mxu0 0.0
        %513 = vmatpush1.msra.mxu0 0.0
        %514 = vmatprep.subr.mxu0 0.0
        %515 = vmatpush1.msra.mxu0 0.0
        %516 = vmatprep.subr.mxu0 0.0
        %517 = vmatpush1.msra.mxu0 0.0
        %518 = vmatprep.subr.mxu0 0.0
        %519 = vmatpush1.msra.mxu0 0.0
        %520 = vmatprep.subr.mxu0 0.0
        %521 = vmatpush1.msra.mxu0 0.0
        %522 = vmatprep.subr.mxu0 0.0
        %523 = vmatpush1.msra.mxu0 0.0
        %524 = vmatprep.subr.mxu0 0.0
        %525 = vmatpush1.msra.mxu0 0.0
        %526 = vmatprep.subr.mxu0 0.0
        %527 = vmatpush1.msra.mxu0 0.0
        %528 = vmatprep.subr.mxu0 0.0
        %529 = vmatpush1.msra.mxu0 0.0
        %530 = vmatprep.subr.mxu0 0.0
        %531 = vmatpush1.msra.mxu0 0.0
        %532 = vmatprep.subr.mxu0 0.0
        %533 = vmatpush1.msra.mxu0 0.0
        %534 = vmatprep.subr.mxu0 0.0
        %535 = vmatpush1.msra.mxu0 0.0
        %536 = vmatprep.subr.mxu0 0.0
        %537 = vmatpush1.msra.mxu0 0.0
        %538 = vmatprep.subr.mxu0 0.0
        %539 = vmatpush1.msra.mxu0 0.0
        %540 = vmatprep.subr.mxu0 0.0
        %541 = vmatpush1.msra.mxu0 0.0
        %542 = vmatprep.subr.mxu0 0.0
        %543 = vmatpush1.msra.mxu0 0.0
        %544 = vmatprep.subr.mxu0 0.0
        %545 = vmatpush1.msra.mxu0 0.0
        %546 = vmatprep.subr.mxu0 0.0
        %547 = vmatpush1.msra.mxu0 0.0
        %548 = vmatprep.subr.mxu0 0.0
        %549 = vmatpush1.msra.mxu0 0.0
        %550 = vmatprep.subr.mxu0 0.0
        %551 = vmatpush1.msra.mxu0 0.0
        %552 = vmatprep.subr.mxu0 0.0
        %553 = vmatpush1.msra.mxu0 0.0
        %554 = vmatprep.subr.mxu0 0.0
        %555 = vmatpush1.msra.mxu0 0.0
        %556 = vmatprep.subr.mxu0 0.0
        %557 = vmatpush1.msra.mxu0 0.0
        %558 = vmatprep.subr.mxu0 0.0
        %559 = vmatpush1.msra.mxu0 0.0
        %560 = vmatprep.subr.mxu0 0.0
        %561 = vmatpush1.msra.mxu0 0.0
        %562 = vmatprep.subr.mxu0 0.0
        %563 = vmatpush1.msra.mxu0 0.0
        %564 = vmatprep.subr.mxu0 0.0
        %565 = vmatpush1.msra.mxu0 0.0
        %566 = vmatprep.subr.mxu0 0.0
        %567 = vmatpush1.msra.mxu0 0.0
        %568 = vmatprep.subr.mxu0 0.0
        %569 = vmatpush1.msra.mxu0 0.0
        %570 = vmatprep.mubr.f32.mxu0 0.0
        %571 = vmatmul.mubr.f32.gmra.mrb[0].mxu0 %v433
        %v572 = vpop.f32.mrb[0].mxu0
        %v573 = vadd.f32 %v429, %v572
        %v574 = vpop.f32.mrb[0].mxu0
        %v575 = vadd.f32 %v429, %v574
        %576 = vdwg.mxu0
        %vm577 = vcmask 1041408
        %v578 = vsel %vm577, %v502, -inf
        %v579 = vrot.slane %v578, 4
        %v580 = vmax.f32 %v578, %v579
        %v581 = vrot.slane %v580, 2
        %v582 = vmax.f32 %v580, %v581
        %v583 = vrot.slane %v582, 1
        %v584 = vmax.f32 %v582, %v583
        %v585 = vsel %vm577, %v504, -inf
        %v586 = vrot.slane %v585, 4
        %v587 = vmax.f32 %v585, %v586
        %v588 = vrot.slane %v587, 2
        %v589 = vmax.f32 %v587, %v588
        %v590 = vrot.slane %v589, 1
        %v591 = vmax.f32 %v589, %v590
        %v592 = vsel %vm577, %v573, -inf
        %v593 = vrot.slane %v592, 4
        %v594 = vmax.f32 %v592, %v593
        %v595 = vrot.slane %v594, 2
        %v596 = vmax.f32 %v594, %v595
        %v597 = vrot.slane %v596, 1
        %v598 = vmax.f32 %v596, %v597
        %v599 = vsel %vm577, %v575, -inf
        %v600 = vrot.slane %v599, 4
        %v601 = vmax.f32 %v599, %v600
        %v602 = vrot.slane %v601, 2
        %v603 = vmax.f32 %v601, %v602
        %v604 = vrot.slane %v603, 1
        %v605 = vmax.f32 %v603, %v604
        %v606 = vsub.f32 %v502, %v584
        %v607 = vsub.f32 %v504, %v591
        %v608 = vsub.f32 %v573, %v598
        %v609 = vsub.f32 %v575, %v605
        %v610 = vmul.f32 %v606, 1.442695
        %v611 = vpow.pop %v610
        %v612 = vmul.f32 %v607, 1.442695
        %v613 = vpow.pop %v612
        %v614 = vmul.f32 %v608, 1.442695
        %v615 = vpow.pop %v614
        %v616 = vmul.f32 %v609, 1.442695
        %v617 = vpow.pop %v616
        %v618 = vsel %vm577, %v611, 0.0
        %v619 = vrot.slane %v618, 4
        %v620 = vadd.f32 %v618, %v619
        %v621 = vrot.slane %v620, 2
        %v622 = vadd.f32 %v620, %v621
        %v623 = vrot.slane %v622, 1
        %v624 = vadd.f32 %v622, %v623
        %v625 = vsel %vm577, %v613, 0.0
        %v626 = vrot.slane %v625, 4
        %v627 = vadd.f32 %v625, %v626
        %v628 = vrot.slane %v627, 2
        %v629 = vadd.f32 %v627, %v628
        %v630 = vrot.slane %v629, 1
        %v631 = vadd.f32 %v629, %v630
        %v632 = vsel %vm577, %v615, 0.0
        %v633 = vrot.slane %v632, 4
        %v634 = vadd.f32 %v632, %v633
        %v635 = vrot.slane %v634, 2
        %v636 = vadd.f32 %v634, %v635
        %v637 = vrot.slane %v636, 1
        %v638 = vadd.f32 %v636, %v637
        %v639 = vsel %vm577, %v617, 0.0
        %v640 = vrot.slane %v639, 4
        %v641 = vadd.f32 %v639, %v640
        %v642 = vrot.slane %v641, 2
        %v643 = vadd.f32 %v641, %v642
        %v644 = vrot.slane %v643, 1
        %v645 = vadd.f32 %v643, %v644
        %v646 = vrcp.pop %v624
        %v647 = vrcp.pop %v631
        %v648 = vrcp.pop %v638
        %v649 = vrcp.pop %v645
        %v650 = vmul.f32 %v611, %v646
        %v651 = vmul.f32 %v613, %v647
        %v652 = vmul.f32 %v615, %v648
        %v653 = vmul.f32 %v617, %v649
        %v658 = vcombine.low %v650, %v651
        %v659 = vcombine.low %v652, %v653
        %v661 = vunpack.c.l.s4 1983009808
        %v662 = vunpack.c.0.s8 %v661
        %v663 = vlaneseq
        %v664 = vshrl.u32 %v663, 7
        %v665 = vsub.s32 %v662, %v664
        %v666 = vrot.slane %v658, %v665
        %v668 = vunpack.c.l.s4 1983009808
        %v669 = vunpack.c.0.s8 %v668
        %v670 = vlaneseq
        %v671 = vshrl.u32 %v670, 7
        %v672 = vsub.s32 %v669, %v671
        %v673 = vrot.slane %v659, %v672
        %v674 = vcombine.low %v666, %v673
        %676 = vst [vmem:[%s218] sm:$0xff] %v674
        %s677 = sand.u32 %s137, 1
        %s678 = scalar_lea.sflag [#allocation3], %s677
        %s679 = sand.u32 %s137, 1
        %s680 = smul.addr %s679, 8
        %s681 = scalar_lea.vmem [#allocation2], %s680
        // Predicated region
        $region41: #{policy_forward.1} parent=39 // pred_check
          %p682 = pneg %p147
        $region42: #{policy_forward.1} parent=39 // pred_check_branch
          %684 = sbr.rel (%p682) target = $region44
        $region43: #{policy_forward.1} parent=39 // pred_region
          %s685 = smul.u32 4, %s19
          %s687 = ssub.s32 128, 128
          %688 = vsyncadd %s678, %s687
          %s689 = smul.addr %s685, 32
          %s690 = scalar_lea.hbm %s5, %s689
          %s692 = sshll.u32 %s681, 4
          %s693 = int_to_ptr.vmem [resolvable:$true] %s692
          %695 = dma.vmem_to_hbm [thread:$0]  %s693, 128, %s690, %s678
        $region44: #{policy_forward.1} parent=39 // pred_fallthru
          _
      $region40: #{policy_forward.1} parent=5 // pred_fallthru
        _
      %p696 = scmp.le.s32.totalorder 2, %s14
      // Predicated region
      $region45: #{policy_forward.1} parent=5 // pred_check
        %p697 = pneg %p696
      $region46: #{policy_forward.1} parent=5 // pred_check_branch
        %699 = sbr.rel (%p697) target = $region48
      $region47: #{policy_forward.1} parent=5 // pred_region
        %s700 = ssub.s32 %s14, 2
        // Predicated region
        $region49: #{policy_forward.1} parent=47 // pred_check
          %p701 = pneg %p153
        $region50: #{policy_forward.1} parent=47 // pred_check_branch
          %703 = sbr.rel (%p701) target = $region52
        $region51: #{policy_forward.1} parent=47 // pred_region
          %s704 = sand.u32 %s138, 1
          %s705 = scalar_lea.sflag [#allocation3], %s704
          %s706 = sand.u32 %s138, 1
          %s707 = smul.addr %s706, 8
          %s708 = scalar_lea.vmem [#allocation2], %s707
          %709 = dma.done %s705, 128
        $region52: #{policy_forward.1} parent=47 // pred_fallthru
          _
      $region48: #{policy_forward.1} parent=5 // pred_fallthru
        _
    $region6: #{policy_forward.1} parent=1 // loop_footer
      %s18 = sadd.s32 1, %s14
    $region7: #{policy_forward.1} parent=1 // loop_footer_branch
      %13 = sbr.rel target = $region3
    $region8: #{policy_forward.1} parent=1 // loop_exit
      _
    %710 = vsyncpa [#allocation3], 1
    %s711 = scalar_lea.sflag [#allocation3], 1
    %712 = vsyncpa %s711, 1

</llo_original>
